<compile_context>
chip_gen: v6e
topology: v6e:2x2x1
jax: 0.10.0
libtpu: 0.0.40
codegen_flags: <defaults>
</compile_context>

<pallas_src>
import functools

import jax
import jax.numpy as jnp
from jax.experimental import pallas as pl
from jax.experimental.pallas import tpu as pltpu


def _pack_layout(in_ch, hidden, action):
    """Lane offsets of each parameter inside the single packed buffer."""
    off_w1 = 0                      # (hidden, hidden)  head Linear 1 weight
    off_wc = off_w1 + hidden        # (hidden, in_ch)   fused 1x1-conv weight (transposed)
    off_bc = off_wc + in_ch         # (hidden, 1)       fused 1x1-conv bias
    off_w2 = off_bc + 1             # (hidden, action)  head Linear 2 weight
    off_b1 = off_w2 + action        # row 0: (1, hidden) head Linear 1 bias
    off_b2 = off_b1 + hidden        # row 0: (1, action) head Linear 2 bias
    width = off_b2 + action
    width = ((width + 127) // 128) * 128   # lane-align the single param DMA
    return off_w1, off_wc, off_bc, off_w2, off_b1, off_b2, width


def prepare_params(params, in_ch, hidden, action):
    """One-time (offline) parameter prep, hoisted out of the hot path.

    Fuses the two 1x1 convs algebraically (no nonlinearity between them):
        (x @ w_t + b_t) @ w_c + b_c == x @ (w_t @ w_c) + (b_t @ w_c + b_c)
    and packs every weight/bias into a single contiguous f32 buffer so the
    kernel issues exactly one parameter DMA.
    """
    w_t, b_t, w_c, b_c, w_h1, b_h1, w_h2, b_h2 = params
    w_fused = w_t @ w_c                    # (in_ch, hidden)
    b_fused = b_t @ w_c + b_c              # (1, hidden)

    off_w1, off_wc, off_bc, off_w2, off_b1, off_b2, width = _pack_layout(
        in_ch, hidden, action)
    wpack = jnp.zeros((hidden, width), jnp.float32)
    wpack = wpack.at[:, off_w1:off_w1 + hidden].set(w_h1)
    wpack = wpack.at[:, off_wc:off_wc + in_ch].set(w_fused.T)
    wpack = wpack.at[:, off_bc:off_bc + 1].set(b_fused.T)
    wpack = wpack.at[:, off_w2:off_w2 + action].set(w_h2)
    wpack = wpack.at[0:1, off_b1:off_b1 + hidden].set(b_h1)
    wpack = wpack.at[0:1, off_b2:off_b2 + action].set(b_h2)
    return wpack


def _build_actor_kernel(n, hw, in_ch, hidden, action, layout):
    off_w1, off_wc, off_bc, off_w2, off_b1, off_b2, _ = layout
    p = n * hw
    inv_hw = 1.0 / float(hw)

    def kernel(x_ref, wpack_ref, out_ref):
        # x_ref:     (in_ch, N*HW)   channels-first, whole batch
        # wpack_ref: (hidden, PACK)  single packed parameter buffer
        # out_ref:   (N, action)
        wp = wpack_ref[...]
        w1 = wp[:, off_w1:off_w1 + hidden]          # (hidden, hidden)
        w_conv = wp[:, off_wc:off_wc + in_ch]       # (hidden, in_ch)
        b_conv = wp[:, off_bc:off_bc + 1]           # (hidden, 1)
        w2 = wp[:, off_w2:off_w2 + action]          # (hidden, action)
        b1 = wp[0:1, off_b1:off_b1 + hidden]        # (1, hidden)
        b2 = wp[0:1, off_b2:off_b2 + action]        # (1, action)

        # Fused transition+core 1x1 convs (+bias) + ReLU, whole batch in ONE
        # MXU matmul.  Activation (hidden, N*HW) is lane-dense (N*HW % 128 == 0).
        y = jnp.dot(w_conv, x_ref[...], preferred_element_type=jnp.float32) + b_conv
        y = jnp.maximum(y, 0.0)                     # (hidden, N*HW)

        # AdaptiveAvgPool2d(1) as an MXU matmul against a block-diagonal 1/HW
        # matrix built in-kernel from iotas (no DMA, no per-sample reductions,
        # no masked single-lane column stores, no VMEM scratch round trip).
        pix = jax.lax.broadcasted_iota(jnp.int32, (n, p), 1)
        row = jax.lax.broadcasted_iota(jnp.int32, (n, p), 0)
        lo = row * hw
        mask = (pix >= lo) & (pix < lo + hw)
        pool_t = jnp.where(mask, jnp.float32(inv_hw), jnp.float32(0.0))  # (N, N*HW)
        pooled = jax.lax.dot_general(               # (N, hidden)  == pool_t @ y.T
            pool_t, y, (((1,), (1,)), ((), ())),
            preferred_element_type=jnp.float32)

        # MLP head, row-oriented so the result lands directly as (N, action).
        h = jnp.maximum(
            jnp.dot(pooled, w1, preferred_element_type=jnp.float32) + b1, 0.0)
        o = jnp.dot(h, w2, preferred_element_type=jnp.float32) + b2     # (N, action)

        # Exact sigmoid (output is a single tiny vreg; approx recip not worth it).
        out_ref[...] = 1.0 / (1.0 + jnp.exp(-o))

    return kernel


@functools.partial(jax.jit, static_argnames=("action_size",))
def actor_forward(state_nchw, wpack, action_size):
    """state_nchw: (N, 4, H, W) f32, wpack: prepare_params() output
    -> (N, action_size) f32."""
    n, in_ch, hgt, wid = state_nchw.shape
    hw = hgt * wid
    p = n * hw
    hidden = wpack.shape[0]
    layout = _pack_layout(in_ch, hidden, action_size)
    pack_w = layout[-1]
    assert wpack.shape == (hidden, pack_w), wpack.shape

    # Channels-first pixel layout (Cin, N*HW): one tiny fused transpose+reshape
    # inside the jit; keeps every large in-kernel activation lane-dense.
    x_cols = jnp.transpose(state_nchw, (1, 0, 2, 3)).reshape(in_ch, p)

    kernel = _build_actor_kernel(n, hw, in_ch, hidden, action_size, layout)

    flops = (2 * p * hidden * (in_ch + n)
             + 2 * n * hidden * (hidden + action_size))
    cost = pl.CostEstimate(
        flops=flops,
        transcendentals=n * action_size,
        bytes_accessed=4 * (in_ch * p + hidden * pack_w + n * action_size))

    # Whole batch in one grid step: at these shapes the ~0.35us per-grid-step
    # pipeline overhead dominates, and total VMEM footprint is well under 1 MiB
    # on every TPU generation.
    # TODO(synk): for large N, tile the batch as a leading "parallel" grid axis
    # (engages v7x's second TensorCore) and set vmem_limit_bytes explicitly
    # against per-generation scoped-VMEM limits (16 MiB v5e / 32 MiB v6e /
    # 32-of-64 MiB v7x).
    return pl.pallas_call(
        kernel,
        out_shape=jax.ShapeDtypeStruct((n, action_size), jnp.float32),
        grid_spec=pltpu.PrefetchScalarGridSpec(
            num_scalar_prefetch=0,
            grid=(1,),
            in_specs=[
                pl.BlockSpec((in_ch, p), lambda i: (0, 0)),
                pl.BlockSpec((hidden, pack_w), lambda i: (0, 0)),
            ],
            out_specs=pl.BlockSpec((n, action_size), lambda i: (0, 0)),
        ),
        compiler_params=pltpu.CompilerParams(
            dimension_semantics=("arbitrary",)),
        cost_estimate=cost,
    )(x_cols, wpack)


def init_params(key, in_ch=4, mid_ch=3, hidden=32, action=4):
    ks = jax.random.split(key, 8)
    sc = 0.1
    w_t = sc * jax.random.normal(ks[0], (in_ch, mid_ch), jnp.float32)
    b_t = sc * jax.random.normal(ks[1], (1, mid_ch), jnp.float32)
    w_c = sc * jax.random.normal(ks[2], (mid_ch, hidden), jnp.float32)
    b_c = sc * jax.random.normal(ks[3], (1, hidden), jnp.float32)
    w_h1 = sc * jax.random.normal(ks[4], (hidden, hidden), jnp.float32)
    b_h1 = sc * jax.random.normal(ks[5], (1, hidden), jnp.float32)
    w_h2 = sc * jax.random.normal(ks[6], (hidden, action), jnp.float32)
    b_h2 = sc * jax.random.normal(ks[7], (1, action), jnp.float32)
    return (w_t, b_t, w_c, b_c, w_h1, b_h1, w_h2, b_h2)


def actor_reference(state_nchw, params):
    """Pure-JAX reference mirroring the PyTorch forward (unfused)."""
    (w_t, b_t, w_c, b_c, w_h1, b_h1, w_h2, b_h2) = params
    N, Cin, H, W = state_nchw.shape
    x = jnp.transpose(state_nchw, (0, 2, 3, 1)).reshape(N, H * W, Cin)
    y = x @ w_t + b_t
    y = jnp.maximum(y @ w_c + b_c, 0.0)
    pooled = jnp.mean(y, axis=1)                       # (N, hidden)
    h = jnp.maximum(pooled @ w_h1 + b_h1, 0.0)
    o = h @ w_h2 + b_h2
    return jax.nn.sigmoid(o)


if __name__ == "__main__":
    key = jax.random.PRNGKey(0)
    k_x, k_p = jax.random.split(key)

    # batch=2, channels=4 (per Conv2d(4,3,1)), spatial=16, hidden=32, action=4
    N, C, H, W = 2, 4, 16, 16
    hidden, action = 32, 4

    state = jax.random.normal(k_x, (N, C, H, W), jnp.float32)
    params = init_params(k_p, in_ch=C, mid_ch=3, hidden=hidden, action=action)

    # One-time parameter preprocessing (outside the per-step hot path).
    wpack = jax.block_until_ready(prepare_params(params, C, hidden, action))

    out = jax.block_until_ready(actor_forward(state, wpack, action_size=action))
    ref = actor_reference(state, params)

    assert out.shape == (N, action), out.shape
    # Tolerance covers fp reassociation from the conv fusion + default matmul
    # precision in the pure-JAX reference.
    assert jnp.allclose(out, ref, rtol=2e-3, atol=2e-3), (out, ref)

    print("KERNEL_OK")
</pallas_src>

<mosaic_0001>
module attributes {stable_mosaic.version = 11 : i64} {
  func.func @kernel(%arg0: i32, %arg1: memref<4x512xf32, #tpu.memory_space<vmem>>, %arg2: memref<32x128xf32, #tpu.memory_space<vmem>>, %arg3: memref<2x4xf32, #tpu.memory_space<vmem>>) attributes {dimension_semantics = [#tpu.dimension_semantics<arbitrary>], iteration_bounds = array<i64: 1>, scalar_prefetch = 0 : i64, scratch_operands = 0 : i64, tpu.core_type = #tpu.core_type<tc>, window_params = [{pipeline_mode = #tpu.pipeline_mode<synchronous>, transform_indices = @transform_0, window_bounds = array<i64: 4, 512>}, {pipeline_mode = #tpu.pipeline_mode<synchronous>, transform_indices = @transform_1, window_bounds = array<i64: 32, 128>}, {pipeline_mode = #tpu.pipeline_mode<synchronous>, transform_indices = @transform_2, window_bounds = array<i64: 2, 4>}]} {
    %c0 = arith.constant 0 : index
    %c0_0 = arith.constant 0 : index
    %0 = vector.load %arg2[%c0, %c0_0] : memref<32x128xf32, #tpu.memory_space<vmem>>, vector<32x128xf32>
    %1 = vector.extract_strided_slice %0 {offsets = [0, 0], sizes = [32, 32], strides = [1, 1]} : vector<32x128xf32> to vector<32x32xf32>
    %2 = vector.extract_strided_slice %0 {offsets = [0, 32], sizes = [32, 4], strides = [1, 1]} : vector<32x128xf32> to vector<32x4xf32>
    %3 = vector.extract_strided_slice %0 {offsets = [0, 36], sizes = [32, 1], strides = [1, 1]} : vector<32x128xf32> to vector<32x1xf32>
    %4 = vector.extract_strided_slice %0 {offsets = [0, 37], sizes = [32, 4], strides = [1, 1]} : vector<32x128xf32> to vector<32x4xf32>
    %5 = vector.extract_strided_slice %0 {offsets = [0, 41], sizes = [1, 32], strides = [1, 1]} : vector<32x128xf32> to vector<1x32xf32>
    %6 = vector.extract_strided_slice %0 {offsets = [0, 73], sizes = [1, 4], strides = [1, 1]} : vector<32x128xf32> to vector<1x4xf32>
    %c0_1 = arith.constant 0 : index
    %c0_2 = arith.constant 0 : index
    %7 = vector.load %arg1[%c0_1, %c0_2] : memref<4x512xf32, #tpu.memory_space<vmem>>, vector<4x512xf32>
    %cst = arith.constant dense<0.000000e+00> : vector<32x512xf32>
    %8 = tpu.matmul %2, %7, %cst {dimension_numbers = #tpu.dot_dimension_numbers<[1], [0], [0], [1], [0, 0, 1, 1], [], []>} : vector<32x4xf32>, vector<4x512xf32>, vector<32x512xf32> -> vector<32x512xf32>
    %9 = vector.broadcast %3 : vector<32x1xf32> to vector<32x512xf32>
    %10 = arith.addf %8, %9 : vector<32x512xf32>
    %cst_3 = arith.constant 0.000000e+00 : f32
    %11 = vector.broadcast %cst_3 : f32 to vector<32x512xf32>
    %12 = arith.maximumf %10, %11 : vector<32x512xf32>
    %13 = tpu.iota {dimensions = array<i32: 1>} : vector<2x512xi32>
    %14 = tpu.iota {dimensions = array<i32: 0>} : vector<2x512xi32>
    %c256_i32 = arith.constant 256 : i32
    %15 = vector.broadcast %c256_i32 : i32 to vector<2x512xi32>
    %16 = arith.muli %14, %15 : vector<2x512xi32>
    %17 = arith.cmpi sge, %13, %16 : vector<2x512xi32>
    %c256_i32_4 = arith.constant 256 : i32
    %18 = vector.broadcast %c256_i32_4 : i32 to vector<2x512xi32>
    %19 = arith.addi %16, %18 : vector<2x512xi32>
    %20 = arith.cmpi slt, %13, %19 : vector<2x512xi32>
    %21 = arith.andi %17, %20 : vector<2x512xi1>
    %cst_5 = arith.constant 3.906250e-03 : f32
    %cst_6 = arith.constant 0.000000e+00 : f32
    %22 = vector.broadcast %cst_5 : f32 to vector<2x512xf32>
    %23 = vector.broadcast %cst_6 : f32 to vector<2x512xf32>
    %24 = arith.select %21, %22, %23 : vector<2x512xi1>, vector<2x512xf32>
    %cst_7 = arith.constant dense<0.000000e+00> : vector<2x32xf32>
    %25 = tpu.matmul %24, %12, %cst_7 {dimension_numbers = #tpu.dot_dimension_numbers<[1], [1], [0], [0], [0, 0, 1, 0], [], []>} : vector<2x512xf32>, vector<32x512xf32>, vector<2x32xf32> -> vector<2x32xf32>
    %cst_8 = arith.constant dense<0.000000e+00> : vector<2x32xf32>
    %26 = tpu.matmul %25, %1, %cst_8 {dimension_numbers = #tpu.dot_dimension_numbers<[1], [0], [0], [1], [0, 0, 1, 1], [], []>} : vector<2x32xf32>, vector<32x32xf32>, vector<2x32xf32> -> vector<2x32xf32>
    %27 = vector.broadcast %5 : vector<1x32xf32> to vector<2x32xf32>
    %28 = arith.addf %26, %27 : vector<2x32xf32>
    %cst_9 = arith.constant 0.000000e+00 : f32
    %29 = vector.broadcast %cst_9 : f32 to vector<2x32xf32>
    %30 = arith.maximumf %28, %29 : vector<2x32xf32>
    %cst_10 = arith.constant dense<0.000000e+00> : vector<2x4xf32>
    %31 = tpu.matmul %30, %4, %cst_10 {dimension_numbers = #tpu.dot_dimension_numbers<[1], [0], [0], [1], [0, 0, 1, 1], [], []>} : vector<2x32xf32>, vector<32x4xf32>, vector<2x4xf32> -> vector<2x4xf32>
    %32 = vector.broadcast %6 : vector<1x4xf32> to vector<2x4xf32>
    %33 = arith.addf %31, %32 : vector<2x4xf32>
    %cst_11 = arith.constant 0.000000e+00 : f32
    %34 = vector.broadcast %cst_11 : f32 to vector<2x4xf32>
    %35 = arith.subf %34, %33 : vector<2x4xf32>
    %36 = math.exp %35 : vector<2x4xf32>
    %cst_12 = arith.constant 1.000000e+00 : f32
    %37 = vector.broadcast %cst_12 : f32 to vector<2x4xf32>
    %38 = arith.addf %37, %36 : vector<2x4xf32>
    %cst_13 = arith.constant 1.000000e+00 : f32
    %39 = vector.broadcast %cst_13 : f32 to vector<2x4xf32>
    %40 = arith.divf %39, %38 : vector<2x4xf32>
    %c0_14 = arith.constant 0 : index
    %c0_15 = arith.constant 0 : index
    %41 = vector.load %arg3[%c0_14, %c0_15] : memref<2x4xf32, #tpu.memory_space<vmem>>, vector<2x4xf32>
    tpu.vector_store %arg3[%c0_14, %c0_15], %40 {strides = array<i32>} : memref<2x4xf32, #tpu.memory_space<vmem>>, vector<2x4xf32>,
    return
  }
  func.func @transform_0(%arg0: i32) -> (i32, i32) {
    %c0_i32 = arith.constant 0 : i32
    %c0_i32_0 = arith.constant 0 : i32
    %c0_i32_1 = arith.constant 0 : i32
    return %c0_i32, %c0_i32_0 : i32, i32
  }
  func.func @transform_1(%arg0: i32) -> (i32, i32) {
    %c0_i32 = arith.constant 0 : i32
    %c0_i32_0 = arith.constant 0 : i32
    %c0_i32_1 = arith.constant 0 : i32
    return %c0_i32, %c0_i32_0 : i32, i32
  }
  func.func @transform_2(%arg0: i32) -> (i32, i32) {
    %c0_i32 = arith.constant 0 : i32
    %c0_i32_0 = arith.constant 0 : i32
    %c0_i32_1 = arith.constant 0 : i32
    return %c0_i32, %c0_i32_0 : i32, i32
  }
}

</mosaic_0001>

<llo_original>
// kernel: actor_forward.1
$region0: #{actor_forward.1}
  #allocation0 [shape = 'u32[]', space=smem, size = 0x4, offset = 0x4, fixed_abs, tag = 'smem constant byte address 0x4 - core index']
  #allocation1 [shape = 'u32[144,128]{1,0:T(1,128)}', space=vmem, size = 0x12000, scoped, tag = 'internal scratch']
  %s0 = inlined_call_operand.vmem [shape: f32[4,512], index: 0, kind: input, shape index: {}]
  %s1 = inlined_call_operand.vmem [shape: f32[32,128], index: 1, kind: input, shape index: {}]
  %s2 = inlined_call_operand.hbm [shape: f32[2,4], index: 2, kind: output, shape index: {}]
  %s3 = sld [smem:[#allocation0]]
  $region18: #{actor_forward.1} parent=0
    _
  %s5 = ssub.s32 1, %s3
  %s6 = scalar_select 0, %s5, %s3
  $region1: #{actor_forward.1} parent=0
    #allocation2 [shape = 'u8[1024]{0}', space=vmem, size = 0x400, scoped, tag = 'output window, operand 0, single buffered']
    #allocation3 [shape = 's32[1]{0}', space=sflag, size = 0x4, scoped, tag = 'scoped memory for actor_forward.1']
    %7 = vsyncpa [#allocation3], 0
    // Predicated region
    $region2: #{actor_forward.1} parent=1 // pred_check
      _
    $region3: #{actor_forward.1} parent=1 // pred_check_branch
      %9 = sbr.rel (0) target = $region5
    $region4: #{actor_forward.1} parent=1 // pred_region
      _
    $region5: #{actor_forward.1} parent=1 // pred_fallthru
      _
    // Predicated region
    $region6: #{actor_forward.1} parent=1 // pred_check
      _
    $region7: #{actor_forward.1} parent=1 // pred_check_branch
      %11 = sbr.rel (0) target = $region9
    $region8: #{actor_forward.1} parent=1 // pred_region
      _
    $region9: #{actor_forward.1} parent=1 // pred_fallthru
      _
    %v12 = vld [vmem:[%s1] sm:$0xff]
    %v13 = vld [vmem:[%s1 + $0x8] sm:$0xff]
    %v14 = vld [vmem:[%s1 + $0x10] sm:$0xff]
    %v15 = vld [vmem:[%s1 + $0x18] sm:$0xff]
    %v16 = vld [vmem:[%s0] sm:$0xff]
    %v17 = vld [vmem:[%s0 + $0x8] sm:$0xff]
    %19 = vset.pattern.permute.xlu0 36
    %20 = vperm.xlu0 %19, %v12
    %v21 = vpop.permute.xlu0 %20
    %24 = vset.pattern.permute.xlu0 36
    %25 = vperm.xlu0 %24, %v13
    %v26 = vpop.permute.xlu0 %25
    %29 = vset.pattern.permute.xlu0 36
    %30 = vperm.xlu0 %29, %v14
    %v31 = vpop.permute.xlu0 %30
    %34 = vset.pattern.permute.xlu0 36
    %35 = vperm.xlu0 %34, %v15
    %v36 = vpop.permute.xlu0 %35
    %38 = vrot.lane.b32.xlu0 %v12, 96
    %v39 = vpop.permute.xlu0 %38
    %40 = vrot.lane.b32.xlu0 %v13, 96
    %v41 = vpop.permute.xlu0 %40
    %42 = vrot.lane.b32.xlu0 %v14, 96
    %v43 = vpop.permute.xlu0 %42
    %44 = vrot.lane.b32.xlu0 %v15, 96
    %v45 = vpop.permute.xlu0 %44
    %v48 = vcombine.high %v16, %v16
    %v49 = vcombine.high %v17, %v17
    %vm50 = vcmask 31744
    %v51 = vsel %vm50, %v39, 0
    %v53 = vsel %vm50, %v41, 0
    %v55 = vsel %vm50, %v43, 0
    %v57 = vsel %vm50, %v45, 0
    %vm59 = vcmask 1043456
    %v60 = vsel %vm59, %v16, 0
    %v62 = vsel %vm59, %v48, 0
    %v64 = vsel %vm59, %v17, 0
    %v66 = vsel %vm59, %v49, 0
    %68 = vmatprep.subr.mxu0 0.0
    %69 = vmatpush1.msra.mxu0 0.0
    %70 = vmatprep.subr.mxu0 0.0
    %71 = vmatpush1.msra.mxu0 0.0
    %72 = vmatprep.subr.mxu0 0.0
    %73 = vmatpush1.msra.mxu0 0.0
    %74 = vmatprep.subr.mxu0 0.0
    %75 = vmatpush1.msra.mxu0 0.0
    %76 = vmatprep.subr.mxu0 0.0
    %77 = vmatpush1.msra.mxu0 0.0
    %78 = vmatprep.subr.mxu0 0.0
    %79 = vmatpush1.msra.mxu0 0.0
    %80 = vmatprep.subr.mxu0 0.0
    %81 = vmatpush1.msra.mxu0 0.0
    %82 = vmatprep.subr.mxu0 0.0
    %83 = vmatpush1.msra.mxu0 0.0
    %84 = vmatprep.subr.mxu0 0.0
    %85 = vmatpush1.msra.mxu0 0.0
    %86 = vmatprep.subr.mxu0 0.0
    %87 = vmatpush1.msra.mxu0 0.0
    %88 = vmatprep.subr.mxu0 0.0
    %89 = vmatpush1.msra.mxu0 0.0
    %90 = vmatprep.subr.mxu0 0.0
    %91 = vmatpush1.msra.mxu0 0.0
    %92 = vmatprep.subr.mxu0 0.0
    %93 = vmatpush1.msra.mxu0 0.0
    %94 = vmatprep.subr.mxu0 0.0
    %95 = vmatpush1.msra.mxu0 0.0
    %96 = vmatprep.subr.mxu0 0.0
    %97 = vmatpush1.msra.mxu0 0.0
    %98 = vmatprep.subr.mxu0 %v62
    %99 = vmatpush1.msra.mxu0 %v60
    %100 = vmatprep.subr.mxu0 0.0
    %101 = vmatpush2.msra.mxu0 0.0
    %102 = vmatprep.subr.mxu0 0.0
    %103 = vmatpush2.msra.mxu0 0.0
    %104 = vmatprep.subr.mxu0 0.0
    %105 = vmatpush2.msra.mxu0 0.0
    %106 = vmatprep.subr.mxu0 0.0
    %107 = vmatpush2.msra.mxu0 0.0
    %108 = vmatprep.subr.mxu0 0.0
    %109 = vmatpush2.msra.mxu0 0.0
    %110 = vmatprep.subr.mxu0 0.0
    %111 = vmatpush2.msra.mxu0 0.0
    %112 = vmatprep.subr.mxu0 0.0
    %113 = vmatpush2.msra.mxu0 0.0
    %114 = vmatprep.subr.mxu0 0.0
    %115 = vmatpush2.msra.mxu0 0.0
    %116 = vmatprep.subr.mxu0 0.0
    %117 = vmatpush2.msra.mxu0 0.0
    %118 = vmatprep.subr.mxu0 0.0
    %119 = vmatpush2.msra.mxu0 0.0
    %120 = vmatprep.subr.mxu0 0.0
    %121 = vmatpush2.msra.mxu0 0.0
    %122 = vmatprep.subr.mxu0 0.0
    %123 = vmatpush2.msra.mxu0 0.0
    %124 = vmatprep.subr.mxu0 0.0
    %125 = vmatpush2.msra.mxu0 0.0
    %126 = vmatprep.subr.mxu0 0.0
    %127 = vmatpush2.msra.mxu0 0.0
    %128 = vmatprep.subr.mxu0 0.0
    %129 = vmatpush2.msra.mxu0 0.0
    %130 = vmatprep.subr.mxu0 0.0
    %131 = vmatpush2.msra.mxu0 0.0
    %132 = vmatprep.mubr.f32.mxu0 0.0
    %133 = vmatmul.mubr.f32.gmra.mxu0 %v51
    %v134 = vpop.f32.mrf.mxu0
    %v135 = vadd.f32 %v21, %v134
    %v136 = vpop.f32.mrf.mxu0
    %v137 = vadd.f32 %v21, %v136
    %138 = vmatprep.mubr.f32.mxu0 0.0
    %139 = vmatmul.mubr.f32.gmra.mxu0 %v53
    %v140 = vpop.f32.mrf.mxu0
    %v141 = vadd.f32 %v26, %v140
    %v142 = vpop.f32.mrf.mxu0
    %v143 = vadd.f32 %v26, %v142
    %144 = vmatprep.mubr.f32.mxu0 0.0
    %145 = vmatmul.mubr.f32.gmra.mxu0 %v55
    %v146 = vpop.f32.mrf.mxu0
    %v147 = vadd.f32 %v31, %v146
    %v148 = vpop.f32.mrf.mxu0
    %v149 = vadd.f32 %v31, %v148
    %150 = vmatprep.mubr.f32.mxu0 0.0
    %151 = vmatmul.mubr.f32.gmra.mxu0 %v57
    %v152 = vpop.f32.mrf.mxu0
    %v153 = vadd.f32 %v36, %v152
    %v154 = vpop.f32.mrf.mxu0
    %v155 = vadd.f32 %v36, %v154
    %156 = vdwg.mxu0
    %157 = vmatprep.subr.mxu0 0.0
    %158 = vmatpush1.msra.mxu0 0.0
    %159 = vmatprep.subr.mxu0 0.0
    %160 = vmatpush1.msra.mxu0 0.0
    %161 = vmatprep.subr.mxu0 0.0
    %162 = vmatpush1.msra.mxu0 0.0
    %163 = vmatprep.subr.mxu0 0.0
    %164 = vmatpush1.msra.mxu0 0.0
    %165 = vmatprep.subr.mxu0 0.0
    %166 = vmatpush1.msra.mxu0 0.0
    %167 = vmatprep.subr.mxu0 0.0
    %168 = vmatpush1.msra.mxu0 0.0
    %169 = vmatprep.subr.mxu0 0.0
    %170 = vmatpush1.msra.mxu0 0.0
    %171 = vmatprep.subr.mxu0 0.0
    %172 = vmatpush1.msra.mxu0 0.0
    %173 = vmatprep.subr.mxu0 0.0
    %174 = vmatpush1.msra.mxu0 0.0
    %175 = vmatprep.subr.mxu0 0.0
    %176 = vmatpush1.msra.mxu0 0.0
    %177 = vmatprep.subr.mxu0 0.0
    %178 = vmatpush1.msra.mxu0 0.0
    %179 = vmatprep.subr.mxu0 0.0
    %180 = vmatpush1.msra.mxu0 0.0
    %181 = vmatprep.subr.mxu0 0.0
    %182 = vmatpush1.msra.mxu0 0.0
    %183 = vmatprep.subr.mxu0 0.0
    %184 = vmatpush1.msra.mxu0 0.0
    %185 = vmatprep.subr.mxu0 0.0
    %186 = vmatpush1.msra.mxu0 0.0
    %187 = vmatprep.subr.mxu0 %v66
    %188 = vmatpush1.msra.mxu0 %v64
    %189 = vmatprep.subr.mxu0 0.0
    %190 = vmatpush2.msra.mxu0 0.0
    %191 = vmatprep.subr.mxu0 0.0
    %192 = vmatpush2.msra.mxu0 0.0
    %193 = vmatprep.subr.mxu0 0.0
    %194 = vmatpush2.msra.mxu0 0.0
    %195 = vmatprep.subr.mxu0 0.0
    %196 = vmatpush2.msra.mxu0 0.0
    %197 = vmatprep.subr.mxu0 0.0
    %198 = vmatpush2.msra.mxu0 0.0
    %199 = vmatprep.subr.mxu0 0.0
    %200 = vmatpush2.msra.mxu0 0.0
    %201 = vmatprep.subr.mxu0 0.0
    %202 = vmatpush2.msra.mxu0 0.0
    %203 = vmatprep.subr.mxu0 0.0
    %204 = vmatpush2.msra.mxu0 0.0
    %205 = vmatprep.subr.mxu0 0.0
    %206 = vmatpush2.msra.mxu0 0.0
    %207 = vmatprep.subr.mxu0 0.0
    %208 = vmatpush2.msra.mxu0 0.0
    %209 = vmatprep.subr.mxu0 0.0
    %210 = vmatpush2.msra.mxu0 0.0
    %211 = vmatprep.subr.mxu0 0.0
    %212 = vmatpush2.msra.mxu0 0.0
    %213 = vmatprep.subr.mxu0 0.0
    %214 = vmatpush2.msra.mxu0 0.0
    %215 = vmatprep.subr.mxu0 0.0
    %216 = vmatpush2.msra.mxu0 0.0
    %217 = vmatprep.subr.mxu0 0.0
    %218 = vmatpush2.msra.mxu0 0.0
    %219 = vmatprep.subr.mxu0 0.0
    %220 = vmatpush2.msra.mxu0 0.0
    %221 = vmatprep.mubr.f32.mxu0 0.0
    %222 = vmatmul.mubr.f32.gmra.mxu0 %v51
    %v223 = vpop.f32.mrf.mxu0
    %v224 = vadd.f32 %v21, %v223
    %v225 = vpop.f32.mrf.mxu0
    %v226 = vadd.f32 %v21, %v225
    %227 = vmatprep.mubr.f32.mxu0 0.0
    %228 = vmatmul.mubr.f32.gmra.mxu0 %v53
    %v229 = vpop.f32.mrf.mxu0
    %v230 = vadd.f32 %v26, %v229
    %v231 = vpop.f32.mrf.mxu0
    %v232 = vadd.f32 %v26, %v231
    %233 = vmatprep.mubr.f32.mxu0 0.0
    %234 = vmatmul.mubr.f32.gmra.mxu0 %v55
    %v235 = vpop.f32.mrf.mxu0
    %v236 = vadd.f32 %v31, %v235
    %v237 = vpop.f32.mrf.mxu0
    %v238 = vadd.f32 %v31, %v237
    %239 = vmatprep.mubr.f32.mxu0 0.0
    %240 = vmatmul.mubr.f32.gmra.mxu0 %v57
    %v241 = vpop.f32.mrf.mxu0
    %v242 = vadd.f32 %v36, %v241
    %v243 = vpop.f32.mrf.mxu0
    %v244 = vadd.f32 %v36, %v243
    %245 = vdwg.mxu0
    %v246 = vmax.f32 %v135, 0.0
    %v247 = vmax.f32 %v137, 0.0
    %v248 = vmax.f32 %v224, 0.0
    %v249 = vmax.f32 %v226, 0.0
    %v250 = vmax.f32 %v141, 0.0
    %v251 = vmax.f32 %v143, 0.0
    %v252 = vmax.f32 %v230, 0.0
    %v253 = vmax.f32 %v232, 0.0
    %v254 = vmax.f32 %v147, 0.0
    %v255 = vmax.f32 %v149, 0.0
    %v256 = vmax.f32 %v236, 0.0
    %v257 = vmax.f32 %v238, 0.0
    %v258 = vmax.f32 %v153, 0.0
    %v259 = vmax.f32 %v155, 0.0
    %v260 = vmax.f32 %v242, 0.0
    %v261 = vmax.f32 %v244, 0.0
    %v262 = vlaneseq
    %v263 = vand.u32 %v262, 127
    %v264 = vadd.s32 %v263, 128
    %v265 = vadd.s32 %v263, 256
    %v266 = vadd.s32 %v263, 384
    %v267 = vlaneseq
    %v268 = vshrl.u32 %v267, 7
    %v269 = vmul.u32 %v268, 256
    %vm270 = vcmp.ge.s32.totalorder %v263, %v269
    %vm271 = vcmp.ge.s32.totalorder %v264, %v269
    %vm272 = vcmp.ge.s32.totalorder %v265, %v269
    %vm273 = vcmp.ge.s32.totalorder %v266, %v269
    %v274 = vadd.s32 %v269, 256
    %vm275 = vcmp.lt.s32.totalorder %v263, %v274
    %vm276 = vcmp.lt.s32.totalorder %v264, %v274
    %vm277 = vcmp.lt.s32.totalorder %v265, %v274
    %vm278 = vcmp.lt.s32.totalorder %v266, %v274
    %vm279 = vmand %vm270, %vm275
    %vm280 = vmand %vm271, %vm276
    %vm281 = vmand %vm272, %vm277
    %vm282 = vmand %vm273, %vm278
    %v283 = vsel %vm279, 0.00390625, 0.0
    %v284 = vsel %vm280, 0.00390625, 0.0
    %v285 = vsel %vm281, 0.00390625, 0.0
    %v286 = vsel %vm282, 0.00390625, 0.0
    %287 = vmatprep.subr.mxu0 0.0
    %288 = vmatpush1.xpose.msra.mxu0 0.0
    %289 = vmatprep.subr.mxu0 0.0
    %290 = vmatpush1.xpose.msra.mxu0 0.0
    %291 = vmatprep.subr.mxu0 0.0
    %292 = vmatpush1.xpose.msra.mxu0 0.0
    %293 = vmatprep.subr.mxu0 0.0
    %294 = vmatpush1.xpose.msra.mxu0 0.0
    %295 = vmatprep.subr.mxu0 0.0
    %296 = vmatpush1.xpose.msra.mxu0 0.0
    %297 = vmatprep.subr.mxu0 0.0
    %298 = vmatpush1.xpose.msra.mxu0 0.0
    %299 = vmatprep.subr.mxu0 0.0
    %300 = vmatpush1.xpose.msra.mxu0 0.0
    %301 = vmatprep.subr.mxu0 0.0
    %302 = vmatpush1.xpose.msra.mxu0 0.0
    %303 = vmatprep.subr.mxu0 0.0
    %304 = vmatpush1.xpose.msra.mxu0 0.0
    %305 = vmatprep.subr.mxu0 0.0
    %306 = vmatpush1.xpose.msra.mxu0 0.0
    %307 = vmatprep.subr.mxu0 0.0
    %308 = vmatpush1.xpose.msra.mxu0 0.0
    %309 = vmatprep.subr.mxu0 0.0
    %310 = vmatpush1.xpose.msra.mxu0 0.0
    %311 = vmatprep.subr.mxu0 %v259
    %312 = vmatpush1.xpose.msra.mxu0 %v258
    %313 = vmatprep.subr.mxu0 %v255
    %314 = vmatpush1.xpose.msra.mxu0 %v254
    %315 = vmatprep.subr.mxu0 %v251
    %316 = vmatpush1.xpose.msra.mxu0 %v250
    %317 = vmatprep.subr.mxu0 %v247
    %318 = vmatpush1.xpose.msra.mxu0 %v246
    %319 = vmatprep.subr.mxu0 0.0
    %320 = vmatpush2.xpose.msra.mxu0 0.0
    %321 = vmatprep.subr.mxu0 0.0
    %322 = vmatpush2.xpose.msra.mxu0 0.0
    %323 = vmatprep.subr.mxu0 0.0
    %324 = vmatpush2.xpose.msra.mxu0 0.0
    %325 = vmatprep.subr.mxu0 0.0
    %326 = vmatpush2.xpose.msra.mxu0 0.0
    %327 = vmatprep.subr.mxu0 0.0
    %328 = vmatpush2.xpose.msra.mxu0 0.0
    %329 = vmatprep.subr.mxu0 0.0
    %330 = vmatpush2.xpose.msra.mxu0 0.0
    %331 = vmatprep.subr.mxu0 0.0
    %332 = vmatpush2.xpose.msra.mxu0 0.0
    %333 = vmatprep.subr.mxu0 0.0
    %334 = vmatpush2.xpose.msra.mxu0 0.0
    %335 = vmatprep.subr.mxu0 0.0
    %336 = vmatpush2.xpose.msra.mxu0 0.0
    %337 = vmatprep.subr.mxu0 0.0
    %338 = vmatpush2.xpose.msra.mxu0 0.0
    %339 = vmatprep.subr.mxu0 0.0
    %340 = vmatpush2.xpose.msra.mxu0 0.0
    %341 = vmatprep.subr.mxu0 0.0
    %342 = vmatpush2.xpose.msra.mxu0 0.0
    %343 = vmatprep.subr.mxu0 0.0
    %344 = vmatpush2.xpose.msra.mxu0 0.0
    %345 = vmatprep.subr.mxu0 0.0
    %346 = vmatpush2.xpose.msra.mxu0 0.0
    %347 = vmatprep.subr.mxu0 0.0
    %348 = vmatpush2.xpose.msra.mxu0 0.0
    %349 = vmatprep.subr.mxu0 0.0
    %350 = vmatpush2.xpose.msra.mxu0 0.0
    %351 = vmatprep.mubr.f32.mxu0 %v284
    %352 = vmatmul.mubr.f32.gmra.mxu0 %v283
    %v353 = vpop.f32.mrf.mxu0
    %v354 = vadd.f32 0.0, %v353
    %v355 = vpop.f32.mrf.mxu0
    %356 = vdwg.mxu0
    %357 = vmatprep.subr.mxu0 0.0
    %358 = vmatpush1.xpose.msra.mxu0 0.0
    %359 = vmatprep.subr.mxu0 0.0
    %360 = vmatpush1.xpose.msra.mxu0 0.0
    %361 = vmatprep.subr.mxu0 0.0
    %362 = vmatpush1.xpose.msra.mxu0 0.0
    %363 = vmatprep.subr.mxu0 0.0
    %364 = vmatpush1.xpose.msra.mxu0 0.0
    %365 = vmatprep.subr.mxu0 0.0
    %366 = vmatpush1.xpose.msra.mxu0 0.0
    %367 = vmatprep.subr.mxu0 0.0
    %368 = vmatpush1.xpose.msra.mxu0 0.0
    %369 = vmatprep.subr.mxu0 0.0
    %370 = vmatpush1.xpose.msra.mxu0 0.0
    %371 = vmatprep.subr.mxu0 0.0
    %372 = vmatpush1.xpose.msra.mxu0 0.0
    %373 = vmatprep.subr.mxu0 0.0
    %374 = vmatpush1.xpose.msra.mxu0 0.0
    %375 = vmatprep.subr.mxu0 0.0
    %376 = vmatpush1.xpose.msra.mxu0 0.0
    %377 = vmatprep.subr.mxu0 0.0
    %378 = vmatpush1.xpose.msra.mxu0 0.0
    %379 = vmatprep.subr.mxu0 0.0
    %380 = vmatpush1.xpose.msra.mxu0 0.0
    %381 = vmatprep.subr.mxu0 %v261
    %382 = vmatpush1.xpose.msra.mxu0 %v260
    %383 = vmatprep.subr.mxu0 %v257
    %384 = vmatpush1.xpose.msra.mxu0 %v256
    %385 = vmatprep.subr.mxu0 %v253
    %386 = vmatpush1.xpose.msra.mxu0 %v252
    %387 = vmatprep.subr.mxu0 %v249
    %388 = vmatpush1.xpose.msra.mxu0 %v248
    %389 = vmatprep.subr.mxu0 0.0
    %390 = vmatpush2.xpose.msra.mxu0 0.0
    %391 = vmatprep.subr.mxu0 0.0
    %392 = vmatpush2.xpose.msra.mxu0 0.0
    %393 = vmatprep.subr.mxu0 0.0
    %394 = vmatpush2.xpose.msra.mxu0 0.0
    %395 = vmatprep.subr.mxu0 0.0
    %396 = vmatpush2.xpose.msra.mxu0 0.0
    %397 = vmatprep.subr.mxu0 0.0
    %398 = vmatpush2.xpose.msra.mxu0 0.0
    %399 = vmatprep.subr.mxu0 0.0
    %400 = vmatpush2.xpose.msra.mxu0 0.0
    %401 = vmatprep.subr.mxu0 0.0
    %402 = vmatpush2.xpose.msra.mxu0 0.0
    %403 = vmatprep.subr.mxu0 0.0
    %404 = vmatpush2.xpose.msra.mxu0 0.0
    %405 = vmatprep.subr.mxu0 0.0
    %406 = vmatpush2.xpose.msra.mxu0 0.0
    %407 = vmatprep.subr.mxu0 0.0
    %408 = vmatpush2.xpose.msra.mxu0 0.0
    %409 = vmatprep.subr.mxu0 0.0
    %410 = vmatpush2.xpose.msra.mxu0 0.0
    %411 = vmatprep.subr.mxu0 0.0
    %412 = vmatpush2.xpose.msra.mxu0 0.0
    %413 = vmatprep.subr.mxu0 0.0
    %414 = vmatpush2.xpose.msra.mxu0 0.0
    %415 = vmatprep.subr.mxu0 0.0
    %416 = vmatpush2.xpose.msra.mxu0 0.0
    %417 = vmatprep.subr.mxu0 0.0
    %418 = vmatpush2.xpose.msra.mxu0 0.0
    %419 = vmatprep.subr.mxu0 0.0
    %420 = vmatpush2.xpose.msra.mxu0 0.0
    %421 = vmatprep.mubr.f32.mxu0 %v286
    %422 = vmatmul.mubr.f32.gmra.mxu0 %v285
    %v423 = vpop.f32.mrf.mxu0
    %v424 = vadd.f32 %v354, %v423
    %v425 = vpop.f32.mrf.mxu0
    %426 = vdwg.mxu0
    %v427 = vlaneseq
    %v428 = vshrl.u32 %v427, 7
    %v429 = vsub.s32 0, %v428
    %v430 = vrot.slane %v12, %v429
    %432 = vrot.lane.b32.xlu0 %v430, 87
    %v433 = vpop.permute.xlu0 %432
    %vm435 = vcmask 261120
    %v437 = vsel %vm435, %v424, 0
    %439 = vmatprep.subr.mxu0 0.0
    %440 = vmatpush1.msra.mxu0 0.0
    %441 = vmatprep.subr.mxu0 0.0
    %442 = vmatpush1.msra.mxu0 0.0
    %443 = vmatprep.subr.mxu0 0.0
    %444 = vmatpush1.msra.mxu0 0.0
    %445 = vmatprep.subr.mxu0 0.0
    %446 = vmatpush1.msra.mxu0 0.0
    %447 = vmatprep.subr.mxu0 0.0
    %448 = vmatpush1.msra.mxu0 0.0
    %449 = vmatprep.subr.mxu0 0.0
    %450 = vmatpush1.msra.mxu0 0.0
    %451 = vmatprep.subr.mxu0 0.0
    %452 = vmatpush1.msra.mxu0 0.0
    %453 = vmatprep.subr.mxu0 0.0
    %454 = vmatpush1.msra.mxu0 0.0
    %455 = vmatprep.subr.mxu0 0.0
    %456 = vmatpush1.msra.mxu0 0.0
    %457 = vmatprep.subr.mxu0 0.0
    %458 = vmatpush1.msra.mxu0 0.0
    %459 = vmatprep.subr.mxu0 0.0
    %460 = vmatpush1.msra.mxu0 0.0
    %461 = vmatprep.subr.mxu0 0.0
    %462 = vmatpush1.msra.mxu0 0.0
    %463 = vmatprep.subr.mxu0 0.0
    %464 = vmatpush1.msra.mxu0 %v15
    %465 = vmatprep.subr.mxu0 0.0
    %466 = vmatpush1.msra.mxu0 %v14
    %467 = vmatprep.subr.mxu0 0.0
    %468 = vmatpush1.msra.mxu0 %v13
    %469 = vmatprep.subr.mxu0 0.0
    %470 = vmatpush1.msra.mxu0 %v12
    %471 = vmatprep.subr.mxu0 0.0
    %472 = vmatpush2.msra.mxu0 0.0
    %473 = vmatprep.subr.mxu0 0.0
    %474 = vmatpush2.msra.mxu0 0.0
    %475 = vmatprep.subr.mxu0 0.0
    %476 = vmatpush2.msra.mxu0 0.0
    %477 = vmatprep.subr.mxu0 0.0
    %478 = vmatpush2.msra.mxu0 0.0
    %479 = vmatprep.subr.mxu0 0.0
    %480 = vmatpush2.msra.mxu0 0.0
    %481 = vmatprep.subr.mxu0 0.0
    %482 = vmatpush2.msra.mxu0 0.0
    %483 = vmatprep.subr.mxu0 0.0
    %484 = vmatpush2.msra.mxu0 0.0
    %485 = vmatprep.subr.mxu0 0.0
    %486 = vmatpush2.msra.mxu0 0.0
    %487 = vmatprep.subr.mxu0 0.0
    %488 = vmatpush2.msra.mxu0 0.0
    %489 = vmatprep.subr.mxu0 0.0
    %490 = vmatpush2.msra.mxu0 0.0
    %491 = vmatprep.subr.mxu0 0.0
    %492 = vmatpush2.msra.mxu0 0.0
    %493 = vmatprep.subr.mxu0 0.0
    %494 = vmatpush2.msra.mxu0 0.0
    %495 = vmatprep.subr.mxu0 0.0
    %496 = vmatpush2.msra.mxu0 0.0
    %497 = vmatprep.subr.mxu0 0.0
    %498 = vmatpush2.msra.mxu0 0.0
    %499 = vmatprep.subr.mxu0 0.0
    %500 = vmatpush2.msra.mxu0 0.0
    %501 = vmatprep.subr.mxu0 0.0
    %502 = vmatpush2.msra.mxu0 0.0
    %503 = vmatprep.mubr.f32.mxu0 0.0
    %504 = vmatmul.mubr.f32.gmra.mxu0 %v437
    %v505 = vpop.f32.mrf.mxu0
    %v506 = vadd.f32 %v433, %v505
    %v507 = vpop.f32.mrf.mxu0
    %508 = vdwg.mxu0
    %v509 = vmax.f32 %v506, 0.0
    %510 = vrot.lane.b32.xlu0 %v12, 91
    %v511 = vpop.permute.xlu0 %510
    %512 = vrot.lane.b32.xlu0 %v13, 91
    %v513 = vpop.permute.xlu0 %512
    %514 = vrot.lane.b32.xlu0 %v14, 91
    %v515 = vpop.permute.xlu0 %514
    %516 = vrot.lane.b32.xlu0 %v15, 91
    %v517 = vpop.permute.xlu0 %516
    %522 = vrot.lane.b32.xlu0 %v430, 55
    %v523 = vpop.permute.xlu0 %522
    %v526 = vsel %vm435, %v509, 0
    %528 = vmatprep.subr.mxu0 0.0
    %529 = vmatpush1.msra.mxu0 0.0
    %530 = vmatprep.subr.mxu0 0.0
    %531 = vmatpush1.msra.mxu0 0.0
    %532 = vmatprep.subr.mxu0 0.0
    %533 = vmatpush1.msra.mxu0 0.0
    %534 = vmatprep.subr.mxu0 0.0
    %535 = vmatpush1.msra.mxu0 0.0
    %536 = vmatprep.subr.mxu0 0.0
    %537 = vmatpush1.msra.mxu0 0.0
    %538 = vmatprep.subr.mxu0 0.0
    %539 = vmatpush1.msra.mxu0 0.0
    %540 = vmatprep.subr.mxu0 0.0
    %541 = vmatpush1.msra.mxu0 0.0
    %542 = vmatprep.subr.mxu0 0.0
    %543 = vmatpush1.msra.mxu0 0.0
    %544 = vmatprep.subr.mxu0 0.0
    %545 = vmatpush1.msra.mxu0 0.0
    %546 = vmatprep.subr.mxu0 0.0
    %547 = vmatpush1.msra.mxu0 0.0
    %548 = vmatprep.subr.mxu0 0.0
    %549 = vmatpush1.msra.mxu0 0.0
    %550 = vmatprep.subr.mxu0 0.0
    %551 = vmatpush1.msra.mxu0 0.0
    %552 = vmatprep.subr.mxu0 0.0
    %553 = vmatpush1.msra.mxu0 %v517
    %554 = vmatprep.subr.mxu0 0.0
    %555 = vmatpush1.msra.mxu0 %v515
    %556 = vmatprep.subr.mxu0 0.0
    %557 = vmatpush1.msra.mxu0 %v513
    %558 = vmatprep.subr.mxu0 0.0
    %559 = vmatpush1.msra.mxu0 %v511
    %560 = vmatprep.subr.mxu0 0.0
    %561 = vmatpush2.msra.mxu0 0.0
    %562 = vmatprep.subr.mxu0 0.0
    %563 = vmatpush2.msra.mxu0 0.0
    %564 = vmatprep.subr.mxu0 0.0
    %565 = vmatpush2.msra.mxu0 0.0
    %566 = vmatprep.subr.mxu0 0.0
    %567 = vmatpush2.msra.mxu0 0.0
    %568 = vmatprep.subr.mxu0 0.0
    %569 = vmatpush2.msra.mxu0 0.0
    %570 = vmatprep.subr.mxu0 0.0
    %571 = vmatpush2.msra.mxu0 0.0
    %572 = vmatprep.subr.mxu0 0.0
    %573 = vmatpush2.msra.mxu0 0.0
    %574 = vmatprep.subr.mxu0 0.0
    %575 = vmatpush2.msra.mxu0 0.0
    %576 = vmatprep.subr.mxu0 0.0
    %577 = vmatpush2.msra.mxu0 0.0
    %578 = vmatprep.subr.mxu0 0.0
    %579 = vmatpush2.msra.mxu0 0.0
    %580 = vmatprep.subr.mxu0 0.0
    %581 = vmatpush2.msra.mxu0 0.0
    %582 = vmatprep.subr.mxu0 0.0
    %583 = vmatpush2.msra.mxu0 0.0
    %584 = vmatprep.subr.mxu0 0.0
    %585 = vmatpush2.msra.mxu0 0.0
    %586 = vmatprep.subr.mxu0 0.0
    %587 = vmatpush2.msra.mxu0 0.0
    %588 = vmatprep.subr.mxu0 0.0
    %589 = vmatpush2.msra.mxu0 0.0
    %590 = vmatprep.subr.mxu0 0.0
    %591 = vmatpush2.msra.mxu0 0.0
    %592 = vmatprep.mubr.f32.mxu0 0.0
    %593 = vmatmul.mubr.f32.gmra.mxu0 %v526
    %v594 = vpop.f32.mrf.mxu0
    %v595 = vadd.f32 %v523, %v594
    %v596 = vpop.f32.mrf.mxu0
    %597 = vdwg.mxu0
    %v598 = vsub.f32 0.0, %v595
    %v599 = vmul.f32 %v598, 1.442695
    %v600 = vpow.pop %v599
    %v601 = vadd.f32 %v600, 1.0
    %v602 = vrcp.pop %v601
    %v603 = vmul.f32 1.0, %v602
    %vm604 = vcmask 25600
    %605 = vst.msk [vmem:[#allocation2] sm:$0x3] %vm604, %v603
    // Predicated region
    $region10: #{actor_forward.1} parent=1 // pred_check
      _
    $region11: #{actor_forward.1} parent=1 // pred_check_branch
      %607 = sbr.rel (0) target = $region13
    $region12: #{actor_forward.1} parent=1 // pred_region
      %s609 = ssub.s32 32, 32
      %610 = vsyncadd [#allocation3], %s609
      %s612 = sshll.u32 [#allocation2], 4
      %s613 = int_to_ptr.vmem [resolvable:$true] %s612
      %615 = dma.vmem_to_hbm [thread:$0]  %s613, 32, %s2, [#allocation3]
    $region13: #{actor_forward.1} parent=1 // pred_fallthru
      _
    // Predicated region
    $region14: #{actor_forward.1} parent=1 // pred_check
      _
    $region15: #{actor_forward.1} parent=1 // pred_check_branch
      %617 = sbr.rel (0) target = $region17
    $region16: #{actor_forward.1} parent=1 // pred_region
      %618 = dma.done [#allocation3], 32
    $region17: #{actor_forward.1} parent=1 // pred_fallthru
      _
    %619 = vsyncpa [#allocation3], 1

</llo_original>
